<compile_context>
chip_gen: v7x
topology: tpu7x:2x2x1
jax: 0.10.0
libtpu: 0.0.40
codegen_flags: <defaults>
</compile_context>

<pallas_src>
import functools

import jax
import jax.numpy as jnp
from jax.experimental import pallas as pl
from jax.experimental.pallas import tpu as pltpu


def _round_up(x: int, m: int) -> int:
    return (x + m - 1) // m * m


def _ordered_residual_kernel(nz_ref, x_ref, mT_ref, t_ref, o_ref, acc_ref,
                             *, precision):
    """Grid (i, j, k): i over batch tiles, j over Fout tiles, k over Fin tiles."""
    j = pl.program_id(1)
    k = pl.program_id(2)
    nk = pl.num_programs(2)

    @pl.when(k == 0)
    def _init():
        acc_ref[...] = jnp.zeros_like(acc_ref)

    # Skip the matmul for blocks of the (block-)triangular mask that are all
    # zero (roughly half of them for an autoregressive ordering).
    @pl.when(nz_ref[k, j] != 0)
    def _accumulate():
        acc_ref[...] += jnp.dot(
            x_ref[...], mT_ref[...],
            precision=precision,
            preferred_element_type=jnp.float32,
        )

    @pl.when(k == nk - 1)
    def _finalize():
        # `factor` is already folded into the mask, so the epilogue is just the
        # residual add (kept in f32 -> no bf16 VPU path needed on v5e).
        o_ref[...] = (t_ref[...].astype(jnp.float32) + acc_ref[...]).astype(
            o_ref.dtype
        )


@functools.partial(jax.jit, static_argnames=("tm", "tn", "tk", "precision"))
def ordered_residual_1d(
    in_features_arr,
    target_features_arr,
    mask_t_scaled,
    block_nonzero=None,
    *,
    tm: int | None = None,
    tn: int | None = None,
    tk: int | None = None,
    precision=jax.lax.Precision.HIGHEST,
):
    """out = target + x @ mask_t_scaled, with mask_t_scaled = mask.T * factor.

    mask_t_scaled has shape (Fin, Fout) -- already transposed and factor-folded
    (build it once with `build_ordered_mask_t`, e.g. at reorder() time).
    """
    B, Fin = in_features_arr.shape
    Fin_m, Fout = mask_t_scaled.shape
    assert Fin_m == Fin, (Fin_m, Fin)
    assert target_features_arr.shape == (B, Fout)
    out_dtype = target_features_arr.dtype

    # Tile sizes: lane (last) dims multiples of 128, sublane dims multiples of 8.
    # Defaults stay comfortably inside v7x's 32 MiB scoped / 64 MiB physical VMEM
    # even with double-buffering; 128/256-aligned tiles feed v5e/v6e MXUs well.
    if tm is None:
        tm = min(_round_up(B, 8), 128)
    if tn is None:
        tn = min(_round_up(Fout, 128), 256)
    if tk is None:
        tk = min(_round_up(Fin, 128), 512)

    Bp = _round_up(B, tm)
    Foutp = _round_up(Fout, tn)
    Finp = _round_up(Fin, tk)
    nb, nj, nk = Bp // tm, Foutp // tn, Finp // tk

    x, t, mT = in_features_arr, target_features_arr, mask_t_scaled
    if (Bp, Finp) != (B, Fin):
        x = jnp.pad(x, ((0, Bp - B), (0, Finp - Fin)))
    if (Finp, Foutp) != (Fin, Fout):
        mT = jnp.pad(mT, ((0, Finp - Fin), (0, Foutp - Fout)))
    if (Bp, Foutp) != (B, Fout):
        t = jnp.pad(t, ((0, Bp - B), (0, Foutp - Fout)))

    # (nk, nj) int32 table: 1 if mask block (k, j) has any nonzero entry.
    # The mask is static in the module, so in a real deployment this is
    # precomputed once alongside the mask (derived on the fly here for
    # generality; it is cheap and fuses under jit).
    if block_nonzero is None:
        blk = jnp.abs(mT).reshape(nk, tk, nj, tn).sum(axis=(1, 3))
        block_nonzero = (blk > 0).astype(jnp.int32)
    block_nonzero = jnp.asarray(block_nonzero, jnp.int32).reshape(nk, nj)

    flops = 2 * Bp * Finp * Foutp
    bytes_accessed = 4 * (Bp * Finp + Finp * Foutp + 2 * Bp * Foutp)

    kernel = functools.partial(_ordered_residual_kernel, precision=precision)

    out = pl.pallas_call(
        kernel,
        out_shape=jax.ShapeDtypeStruct((Bp, Foutp), out_dtype),
        grid_spec=pltpu.PrefetchScalarGridSpec(
            num_scalar_prefetch=1,  # block_nonzero table -> SMEM
            grid=(nb, nj, nk),
            in_specs=[
                pl.BlockSpec((tm, tk), lambda i, j, k, nz: (i, k)),  # x
                pl.BlockSpec((tk, tn), lambda i, j, k, nz: (k, j)),  # mask.T
                pl.BlockSpec((tm, tn), lambda i, j, k, nz: (i, j)),  # target
            ],
            out_specs=pl.BlockSpec((tm, tn), lambda i, j, k, nz: (i, j)),
            scratch_shapes=[pltpu.VMEM((tm, tn), jnp.float32)],
        ),
        compiler_params=pltpu.CompilerParams(
            dimension_semantics=("parallel", "parallel", "arbitrary"),
            vmem_limit_bytes=32 * 1024 * 1024,
        ),
        cost_estimate=pl.CostEstimate(
            flops=flops, transcendentals=0, bytes_accessed=bytes_accessed
        ),
        # Flattened operands: 0=block_nonzero, 1=x, 2=mask.T, 3=target.
        # Target aliases the output so the residual add is done in place.
        input_output_aliases={3: 0},
    )(block_nonzero, x, mT, t)

    if (Bp, Foutp) != (B, Fout):
        out = out[:B, :Fout]
    return out


def build_ordered_mask(in_features, out_features, auto_connection=True, scale=True):
    """Reference-layout (Fout, Fin) mask, mimicking OrderedLayerMixin1D + reorder()."""
    in_order = jnp.arange(in_features)
    out_order = jnp.arange(out_features) % in_features
    if auto_connection:
        mask = (out_order[:, None] >= in_order[None, :]).astype(jnp.float32)
    else:
        mask = (out_order[:, None] > in_order[None, :]).astype(jnp.float32)
    if scale:
        scaled = mask / mask.sum(axis=1, keepdims=True)
        mask = jnp.where(jnp.isnan(scaled), jnp.zeros_like(scaled), scaled)
    return mask  # (out_features, in_features)


def build_ordered_mask_t(
    in_features, out_features, *, auto_connection=True, scale=True, factor=1.0,
    dtype=jnp.float32,
):
    """Kernel-layout mask: (Fin, Fout), already transposed, row-normalized and
    with `factor` folded in -> no runtime transpose / scale ops at call time."""
    in_order = jnp.arange(in_features)
    out_order = jnp.arange(out_features) % in_features
    if auto_connection:
        m_t = (out_order[None, :] >= in_order[:, None]).astype(dtype)
    else:
        m_t = (out_order[None, :] > in_order[:, None]).astype(dtype)
    if scale:
        col_sum = m_t.sum(axis=0, keepdims=True)  # == mask row sums
        scaled = m_t / col_sum
        m_t = jnp.where(jnp.isnan(scaled), jnp.zeros_like(scaled), scaled)
    return m_t * jnp.asarray(factor, dtype)  # (in_features, out_features)


if __name__ == "__main__":
    key = jax.random.PRNGKey(0)
    k1, k2, k3, k4 = jax.random.split(key, 4)

    # --- Test 1: module-sized shapes (B=8, Fin=32, Fout=32), default tiles. ---
    B, FIN, FOUT, FACTOR = 8, 32, 32, 1.0
    x = jax.random.normal(k1, (B, FIN), dtype=jnp.float32)
    target = jax.random.normal(k2, (B, FOUT), dtype=jnp.float32)

    mask = build_ordered_mask(FIN, FOUT)                       # (Fout, Fin)
    mask_t = build_ordered_mask_t(FIN, FOUT, factor=FACTOR)    # (Fin, Fout)

    ref = target + jnp.dot(x, mask.T, precision=jax.lax.Precision.HIGHEST) * FACTOR
    out = jax.block_until_ready(ordered_residual_1d(x, target, mask_t))
    assert out.shape == ref.shape, (out.shape, ref.shape)
    assert jnp.allclose(out, ref, atol=1e-4, rtol=1e-4), "test1 mismatch"

    # --- Test 2: multi-block grid; exercises tiling, aliasing and zero-block skip. ---
    B2, FIN2, FOUT2, FACTOR2 = 16, 384, 256, 0.5
    x2 = jax.random.normal(k3, (B2, FIN2), dtype=jnp.float32)
    t2 = jax.random.normal(k4, (B2, FOUT2), dtype=jnp.float32)
    mask2 = build_ordered_mask(FIN2, FOUT2)
    mask2_t = build_ordered_mask_t(FIN2, FOUT2, factor=FACTOR2)

    ref2 = t2 + jnp.dot(x2, mask2.T, precision=jax.lax.Precision.HIGHEST) * FACTOR2
    out2 = jax.block_until_ready(
        ordered_residual_1d(x2, t2, mask2_t, tm=16, tn=128, tk=128)
    )
    assert out2.shape == ref2.shape, (out2.shape, ref2.shape)
    assert jnp.allclose(out2, ref2, atol=2e-3, rtol=2e-3), "test2 mismatch"

    print("KERNEL_OK")
</pallas_src>

<mosaic_0001>
module attributes {stable_mosaic.version = 11 : i64} {
  func.func @_ordered_residual_kernel(%arg0: i32, %arg1: i32, %arg2: i32, %arg3: memref<1x1xi32, #tpu.memory_space<smem>>, %arg4: memref<8x128xf32, #tpu.memory_space<vmem>>, %arg5: memref<128x128xf32, #tpu.memory_space<vmem>>, %arg6: memref<8x128xf32, #tpu.memory_space<vmem>>, %arg7: memref<8x128xf32, #tpu.memory_space<vmem>>, %arg8: memref<8x128xf32, #tpu.memory_space<vmem>>) attributes {dimension_semantics = [#tpu.dimension_semantics<parallel>, #tpu.dimension_semantics<parallel>, #tpu.dimension_semantics<arbitrary>], iteration_bounds = array<i64: 1, 1, 1>, scalar_prefetch = 1 : i64, scratch_operands = 1 : i64, tpu.core_type = #tpu.core_type<tc>, window_params = [{transform_indices = @transform_0, window_bounds = array<i64: 8, 128>}, {transform_indices = @transform_1, window_bounds = array<i64: 128, 128>}, {transform_indices = @transform_2, window_bounds = array<i64: 8, 128>}, {transform_indices = @transform_3, window_bounds = array<i64: 8, 128>}]} {
    %c0_i32 = arith.constant 0 : i32
    %0 = arith.cmpi eq, %arg2, %c0_i32 : i32
    %1 = arith.extui %0 : i1 to i32
    %c0_i32_0 = arith.constant 0 : i32
    %2 = arith.cmpi ne, %1, %c0_i32_0 : i32
    scf.if %2 {
      %cst = arith.constant 0.000000e+00 : f32
      %12 = vector.broadcast %cst : f32 to vector<8x128xf32>
      %c0 = arith.constant 0 : index
      %c0_5 = arith.constant 0 : index
      %13 = vector.load %arg8[%c0, %c0_5] : memref<8x128xf32, #tpu.memory_space<vmem>>, vector<8x128xf32>
      tpu.vector_store %arg8[%c0, %c0_5], %12 {strides = array<i32>} : memref<8x128xf32, #tpu.memory_space<vmem>>, vector<8x128xf32>,
    } else {
    }
    %3 = arith.index_cast %arg2 : i32 to index
    %4 = arith.index_cast %arg1 : i32 to index
    %5 = memref.load %arg3[%3, %4] : memref<1x1xi32, #tpu.memory_space<smem>>
    %c0_i32_1 = arith.constant 0 : i32
    %6 = arith.cmpi ne, %5, %c0_i32_1 : i32
    %7 = arith.extui %6 : i1 to i32
    %c0_i32_2 = arith.constant 0 : i32
    %8 = arith.cmpi ne, %7, %c0_i32_2 : i32
    scf.if %8 {
      %c0 = arith.constant 0 : index
      %c0_5 = arith.constant 0 : index
      %12 = vector.load %arg8[%c0, %c0_5] : memref<8x128xf32, #tpu.memory_space<vmem>>, vector<8x128xf32>
      %c0_6 = arith.constant 0 : index
      %c0_7 = arith.constant 0 : index
      %13 = vector.load %arg4[%c0_6, %c0_7] : memref<8x128xf32, #tpu.memory_space<vmem>>, vector<8x128xf32>
      %c0_8 = arith.constant 0 : index
      %c0_9 = arith.constant 0 : index
      %14 = vector.load %arg5[%c0_8, %c0_9] : memref<128x128xf32, #tpu.memory_space<vmem>>, vector<128x128xf32>
      %cst = arith.constant dense<0.000000e+00> : vector<8x128xf32>
      %15 = tpu.matmul %13, %14, %cst {dimension_numbers = #tpu.dot_dimension_numbers<[1], [0], [0], [1], [0, 0, 1, 1], [], []>, precision = #tpu.contract_precision<fp32>} : vector<8x128xf32>, vector<128x128xf32>, vector<8x128xf32> -> vector<8x128xf32>
      %16 = arith.addf %12, %15 : vector<8x128xf32>
      %c0_10 = arith.constant 0 : index
      %c0_11 = arith.constant 0 : index
      %17 = vector.load %arg8[%c0_10, %c0_11] : memref<8x128xf32, #tpu.memory_space<vmem>>, vector<8x128xf32>
      tpu.vector_store %arg8[%c0_10, %c0_11], %16 {strides = array<i32>} : memref<8x128xf32, #tpu.memory_space<vmem>>, vector<8x128xf32>,
    } else {
    }
    %c0_i32_3 = arith.constant 0 : i32
    %9 = arith.cmpi eq, %arg2, %c0_i32_3 : i32
    %10 = arith.extui %9 : i1 to i32
    %c0_i32_4 = arith.constant 0 : i32
    %11 = arith.cmpi ne, %10, %c0_i32_4 : i32
    scf.if %11 {
      %c0 = arith.constant 0 : index
      %c0_5 = arith.constant 0 : index
      %12 = vector.load %arg6[%c0, %c0_5] : memref<8x128xf32, #tpu.memory_space<vmem>>, vector<8x128xf32>
      %c0_6 = arith.constant 0 : index
      %c0_7 = arith.constant 0 : index
      %13 = vector.load %arg8[%c0_6, %c0_7] : memref<8x128xf32, #tpu.memory_space<vmem>>, vector<8x128xf32>
      %14 = arith.addf %12, %13 : vector<8x128xf32>
      %c0_8 = arith.constant 0 : index
      %c0_9 = arith.constant 0 : index
      %15 = vector.load %arg7[%c0_8, %c0_9] : memref<8x128xf32, #tpu.memory_space<vmem>>, vector<8x128xf32>
      tpu.vector_store %arg7[%c0_8, %c0_9], %14 {strides = array<i32>} : memref<8x128xf32, #tpu.memory_space<vmem>>, vector<8x128xf32>,
    } else {
    }
    return
  }
  func.func @transform_0(%arg0: i32, %arg1: i32, %arg2: i32, %arg3: memref<1x1xi32, #tpu.memory_space<smem>>) -> (i32, i32) {
    %c0_i32 = arith.constant 0 : i32
    return %arg0, %arg2 : i32, i32
  }
  func.func @transform_1(%arg0: i32, %arg1: i32, %arg2: i32, %arg3: memref<1x1xi32, #tpu.memory_space<smem>>) -> (i32, i32) {
    %c0_i32 = arith.constant 0 : i32
    return %arg2, %arg1 : i32, i32
  }
  func.func @transform_2(%arg0: i32, %arg1: i32, %arg2: i32, %arg3: memref<1x1xi32, #tpu.memory_space<smem>>) -> (i32, i32) {
    %c0_i32 = arith.constant 0 : i32
    return %arg0, %arg1 : i32, i32
  }
  func.func @transform_3(%arg0: i32, %arg1: i32, %arg2: i32, %arg3: memref<1x1xi32, #tpu.memory_space<smem>>) -> (i32, i32) {
    %c0_i32 = arith.constant 0 : i32
    return %arg0, %arg1 : i32, i32
  }
}

</mosaic_0001>

<llo_original>
// kernel: ordered_residual_1d.1
$region0: #{ordered_residual_1d.1}
  #allocation0 [shape = 'u32[]', space=smem, size = 0x4, offset = 0x4, fixed_abs, tag = 'smem constant byte address 0x4 - core index']
  #allocation1 [shape = 'u32[144,128]{1,0:T(1,128)}', space=vmem, size = 0x12000, scoped, tag = 'internal scratch']
  #allocation2 [shape = 'f32[8,128]{1,0:T(8,128)}', space=vmem, size = 0x1000, scoped, tag = 'scratch operand']
  #allocation3 [shape = 's32[1]{0}', space=sflag, size = 0x4, scoped, tag = 'scoped memory for ordered_residual_1d.1']
  #allocation4 [shape = 's32[1,1]{1,0:T(1,128)S(6)}', space=smem, size = 0x200, scoped, tag = 'prefetched SMEM operand 0']
  %s0 = inlined_call_operand.<no memory space> [shape: s32[1,1], index: 0, kind: input, shape index: {}]
  %s1 = inlined_call_operand.vmem [shape: f32[8,128], index: 1, kind: input, shape index: {}]
  %s2 = inlined_call_operand.vmem [shape: f32[128,128], index: 2, kind: input, shape index: {}]
  %s3 = inlined_call_operand.vmem [shape: f32[8,128], index: 3, kind: input, shape index: {}, may-alias: {3,4}]
  %s4 = inlined_call_operand.vmem [shape: f32[8,128], index: 4, kind: output, shape index: {}, may-alias: {3,4}]
  %s5 = sld [smem:[#allocation0]]
  $region34: #{ordered_residual_1d.1} parent=0
    _
  %s7 = ssub.s32 1, %s5
  %s8 = scalar_select 0, %s7, %s5
  %9 = sst [smem:[#allocation4]] %s0
  // Predicated region
  $region2: #{ordered_residual_1d.1} parent=0 // pred_check
    _
  $region3: #{ordered_residual_1d.1} parent=0 // pred_check_branch
    %11 = sbr.rel (0) target = $region5
  $region4: #{ordered_residual_1d.1} parent=0 // pred_region
    _
  $region5: #{ordered_residual_1d.1} parent=0 // pred_fallthru
    _
  // Predicated region
  $region6: #{ordered_residual_1d.1} parent=0 // pred_check
    _
  $region7: #{ordered_residual_1d.1} parent=0 // pred_check_branch
    %13 = sbr.rel (0) target = $region9
  $region8: #{ordered_residual_1d.1} parent=0 // pred_region
    _
  $region9: #{ordered_residual_1d.1} parent=0 // pred_fallthru
    _
  // Predicated region
  $region10: #{ordered_residual_1d.1} parent=0 // pred_check
    _
  $region11: #{ordered_residual_1d.1} parent=0 // pred_check_branch
    %15 = sbr.rel (0) target = $region13
  $region12: #{ordered_residual_1d.1} parent=0 // pred_region
    _
  $region13: #{ordered_residual_1d.1} parent=0 // pred_fallthru
    _
  %p16 = scmp.eq.s32.totalorder 0, 0
  // Predicated region
  $region14: #{ordered_residual_1d.1} parent=0 // pred_check
    %p17 = pneg %p16
  $region15: #{ordered_residual_1d.1} parent=0 // pred_check_branch
    %19 = sbr.rel (%p17) target = $region17
  $region16: #{ordered_residual_1d.1} parent=0 // pred_region
    %20 = vst [vmem:[#allocation2] sm:$0xff] 0.0
  $region17: #{ordered_residual_1d.1} parent=0 // pred_fallthru
    _
  %s21 = sadd.s32 0, 0
  %s22 = smul.u32 %s21, 128
  %s23 = sadd.s32 %s22, 0
  %s24 = sld [smem:[#allocation4 + %s23]]
  %p25 = scmp.ne.s32.totalorder %s24, 0
  // Predicated region
  $region18: #{ordered_residual_1d.1} parent=0 // pred_check
    %p26 = pneg %p25
  $region19: #{ordered_residual_1d.1} parent=0 // pred_check_branch
    %28 = sbr.rel (%p26) target = $region21
  $region20: #{ordered_residual_1d.1} parent=0 // pred_region
    %v29 = vld [vmem:[#allocation2] sm:$0xff]
    %v30 = vld [vmem:[%s1] sm:$0xff]
    %v31 = vld [vmem:[%s2] sm:$0xff]
    %v32 = vld [vmem:[%s2 + $0x8] sm:$0xff]
    %v33 = vld [vmem:[%s2 + $0x10] sm:$0xff]
    %v34 = vld [vmem:[%s2 + $0x18] sm:$0xff]
    %v35 = vld [vmem:[%s2 + $0x20] sm:$0xff]
    %v36 = vld [vmem:[%s2 + $0x28] sm:$0xff]
    %v37 = vld [vmem:[%s2 + $0x30] sm:$0xff]
    %v38 = vld [vmem:[%s2 + $0x38] sm:$0xff]
    %v39 = vld [vmem:[%s2 + $0x40] sm:$0xff]
    %v40 = vld [vmem:[%s2 + $0x48] sm:$0xff]
    %v41 = vld [vmem:[%s2 + $0x50] sm:$0xff]
    %v42 = vld [vmem:[%s2 + $0x58] sm:$0xff]
    %v43 = vld [vmem:[%s2 + $0x60] sm:$0xff]
    %v44 = vld [vmem:[%s2 + $0x68] sm:$0xff]
    %v45 = vld [vmem:[%s2 + $0x70] sm:$0xff]
    %v46 = vld [vmem:[%s2 + $0x78] sm:$0xff]
    %47 = vmatprep.subr.mxu0 0.0
    %v48 = vand.u32 %v31, 4294901760
    %49 = vmatpush1.msra.mxu0 %v48
    %50 = vmatprep.subr.mxu0 0.0
    %v51 = vand.u32 %v32, 4294901760
    %52 = vmatpush1.msra.mxu0 %v51
    %53 = vmatprep.subr.mxu0 0.0
    %v54 = vand.u32 %v33, 4294901760
    %55 = vmatpush1.msra.mxu0 %v54
    %56 = vmatprep.subr.mxu0 0.0
    %v57 = vand.u32 %v34, 4294901760
    %58 = vmatpush1.msra.mxu0 %v57
    %59 = vmatprep.subr.mxu0 0.0
    %v60 = vand.u32 %v35, 4294901760
    %61 = vmatpush1.msra.mxu0 %v60
    %62 = vmatprep.subr.mxu0 0.0
    %v63 = vand.u32 %v36, 4294901760
    %64 = vmatpush1.msra.mxu0 %v63
    %65 = vmatprep.subr.mxu0 0.0
    %v66 = vand.u32 %v37, 4294901760
    %67 = vmatpush1.msra.mxu0 %v66
    %68 = vmatprep.subr.mxu0 0.0
    %v69 = vand.u32 %v38, 4294901760
    %70 = vmatpush1.msra.mxu0 %v69
    %71 = vmatprep.subr.mxu0 0.0
    %v72 = vand.u32 %v39, 4294901760
    %73 = vmatpush1.msra.mxu0 %v72
    %74 = vmatprep.subr.mxu0 0.0
    %v75 = vand.u32 %v40, 4294901760
    %76 = vmatpush1.msra.mxu0 %v75
    %77 = vmatprep.subr.mxu0 0.0
    %v78 = vand.u32 %v41, 4294901760
    %79 = vmatpush1.msra.mxu0 %v78
    %80 = vmatprep.subr.mxu0 0.0
    %v81 = vand.u32 %v42, 4294901760
    %82 = vmatpush1.msra.mxu0 %v81
    %83 = vmatprep.subr.mxu0 0.0
    %v84 = vand.u32 %v43, 4294901760
    %85 = vmatpush1.msra.mxu0 %v84
    %86 = vmatprep.subr.mxu0 0.0
    %v87 = vand.u32 %v44, 4294901760
    %88 = vmatpush1.msra.mxu0 %v87
    %89 = vmatprep.subr.mxu0 0.0
    %v90 = vand.u32 %v45, 4294901760
    %91 = vmatpush1.msra.mxu0 %v90
    %92 = vmatprep.subr.mxu0 0.0
    %v93 = vand.u32 %v46, 4294901760
    %94 = vmatpush1.msra.mxu0 %v93
    %95 = vmatprep.subr.mxu0 0.0
    %96 = vmatpush1.msra.mxu0 0.0
    %97 = vmatprep.subr.mxu0 0.0
    %98 = vmatpush1.msra.mxu0 0.0
    %99 = vmatprep.subr.mxu0 0.0
    %100 = vmatpush1.msra.mxu0 0.0
    %101 = vmatprep.subr.mxu0 0.0
    %102 = vmatpush1.msra.mxu0 0.0
    %103 = vmatprep.subr.mxu0 0.0
    %104 = vmatpush1.msra.mxu0 0.0
    %105 = vmatprep.subr.mxu0 0.0
    %106 = vmatpush1.msra.mxu0 0.0
    %107 = vmatprep.subr.mxu0 0.0
    %108 = vmatpush1.msra.mxu0 0.0
    %109 = vmatprep.subr.mxu0 0.0
    %110 = vmatpush1.msra.mxu0 0.0
    %111 = vmatprep.subr.mxu0 0.0
    %112 = vmatpush1.msra.mxu0 0.0
    %113 = vmatprep.subr.mxu0 0.0
    %114 = vmatpush1.msra.mxu0 0.0
    %115 = vmatprep.subr.mxu0 0.0
    %116 = vmatpush1.msra.mxu0 0.0
    %117 = vmatprep.subr.mxu0 0.0
    %118 = vmatpush1.msra.mxu0 0.0
    %119 = vmatprep.subr.mxu0 0.0
    %120 = vmatpush1.msra.mxu0 0.0
    %121 = vmatprep.subr.mxu0 0.0
    %122 = vmatpush1.msra.mxu0 0.0
    %123 = vmatprep.subr.mxu0 0.0
    %124 = vmatpush1.msra.mxu0 0.0
    %125 = vmatprep.subr.mxu0 0.0
    %126 = vmatpush1.msra.mxu0 0.0
    %127 = vmatprep.mubr.f32.mxu0 0.0
    %v128 = vand.u32 %v30, 4294901760
    %v129 = vsub.f32 %v30, %v128
    %v130 = vand.u32 %v129, 4294901760
    %v131 = vsub.f32 %v129, %v130
    %v132 = vand.u32 %v131, 4294901760
    %133 = vmatmul.mubr.f32.gmra.mrb[0].mxu0 %v132
    %v134 = vpop.f32.mrb[0].mxu0
    %v135 = vadd.f32 0.0, %v134
    %v136 = vpop.f32.mrb[0].mxu0
    %137 = vdwg.mxu0
    %138 = vmatprep.subr.mxu0 0.0
    %v139 = vand.u32 %v31, 4294901760
    %v140 = vsub.f32 %v31, %v139
    %v141 = vand.u32 %v140, 4294901760
    %v142 = vsub.f32 %v140, %v141
    %v143 = vand.u32 %v142, 4294901760
    %144 = vmatpush1.msra.mxu0 %v143
    %145 = vmatprep.subr.mxu0 0.0
    %v146 = vand.u32 %v32, 4294901760
    %v147 = vsub.f32 %v32, %v146
    %v148 = vand.u32 %v147, 4294901760
    %v149 = vsub.f32 %v147, %v148
    %v150 = vand.u32 %v149, 4294901760
    %151 = vmatpush1.msra.mxu0 %v150
    %152 = vmatprep.subr.mxu0 0.0
    %v153 = vand.u32 %v33, 4294901760
    %v154 = vsub.f32 %v33, %v153
    %v155 = vand.u32 %v154, 4294901760
    %v156 = vsub.f32 %v154, %v155
    %v157 = vand.u32 %v156, 4294901760
    %158 = vmatpush1.msra.mxu0 %v157
    %159 = vmatprep.subr.mxu0 0.0
    %v160 = vand.u32 %v34, 4294901760
    %v161 = vsub.f32 %v34, %v160
    %v162 = vand.u32 %v161, 4294901760
    %v163 = vsub.f32 %v161, %v162
    %v164 = vand.u32 %v163, 4294901760
    %165 = vmatpush1.msra.mxu0 %v164
    %166 = vmatprep.subr.mxu0 0.0
    %v167 = vand.u32 %v35, 4294901760
    %v168 = vsub.f32 %v35, %v167
    %v169 = vand.u32 %v168, 4294901760
    %v170 = vsub.f32 %v168, %v169
    %v171 = vand.u32 %v170, 4294901760
    %172 = vmatpush1.msra.mxu0 %v171
    %173 = vmatprep.subr.mxu0 0.0
    %v174 = vand.u32 %v36, 4294901760
    %v175 = vsub.f32 %v36, %v174
    %v176 = vand.u32 %v175, 4294901760
    %v177 = vsub.f32 %v175, %v176
    %v178 = vand.u32 %v177, 4294901760
    %179 = vmatpush1.msra.mxu0 %v178
    %180 = vmatprep.subr.mxu0 0.0
    %v181 = vand.u32 %v37, 4294901760
    %v182 = vsub.f32 %v37, %v181
    %v183 = vand.u32 %v182, 4294901760
    %v184 = vsub.f32 %v182, %v183
    %v185 = vand.u32 %v184, 4294901760
    %186 = vmatpush1.msra.mxu0 %v185
    %187 = vmatprep.subr.mxu0 0.0
    %v188 = vand.u32 %v38, 4294901760
    %v189 = vsub.f32 %v38, %v188
    %v190 = vand.u32 %v189, 4294901760
    %v191 = vsub.f32 %v189, %v190
    %v192 = vand.u32 %v191, 4294901760
    %193 = vmatpush1.msra.mxu0 %v192
    %194 = vmatprep.subr.mxu0 0.0
    %v195 = vand.u32 %v39, 4294901760
    %v196 = vsub.f32 %v39, %v195
    %v197 = vand.u32 %v196, 4294901760
    %v198 = vsub.f32 %v196, %v197
    %v199 = vand.u32 %v198, 4294901760
    %200 = vmatpush1.msra.mxu0 %v199
    %201 = vmatprep.subr.mxu0 0.0
    %v202 = vand.u32 %v40, 4294901760
    %v203 = vsub.f32 %v40, %v202
    %v204 = vand.u32 %v203, 4294901760
    %v205 = vsub.f32 %v203, %v204
    %v206 = vand.u32 %v205, 4294901760
    %207 = vmatpush1.msra.mxu0 %v206
    %208 = vmatprep.subr.mxu0 0.0
    %v209 = vand.u32 %v41, 4294901760
    %v210 = vsub.f32 %v41, %v209
    %v211 = vand.u32 %v210, 4294901760
    %v212 = vsub.f32 %v210, %v211
    %v213 = vand.u32 %v212, 4294901760
    %214 = vmatpush1.msra.mxu0 %v213
    %215 = vmatprep.subr.mxu0 0.0
    %v216 = vand.u32 %v42, 4294901760
    %v217 = vsub.f32 %v42, %v216
    %v218 = vand.u32 %v217, 4294901760
    %v219 = vsub.f32 %v217, %v218
    %v220 = vand.u32 %v219, 4294901760
    %221 = vmatpush1.msra.mxu0 %v220
    %222 = vmatprep.subr.mxu0 0.0
    %v223 = vand.u32 %v43, 4294901760
    %v224 = vsub.f32 %v43, %v223
    %v225 = vand.u32 %v224, 4294901760
    %v226 = vsub.f32 %v224, %v225
    %v227 = vand.u32 %v226, 4294901760
    %228 = vmatpush1.msra.mxu0 %v227
    %229 = vmatprep.subr.mxu0 0.0
    %v230 = vand.u32 %v44, 4294901760
    %v231 = vsub.f32 %v44, %v230
    %v232 = vand.u32 %v231, 4294901760
    %v233 = vsub.f32 %v231, %v232
    %v234 = vand.u32 %v233, 4294901760
    %235 = vmatpush1.msra.mxu0 %v234
    %236 = vmatprep.subr.mxu0 0.0
    %v237 = vand.u32 %v45, 4294901760
    %v238 = vsub.f32 %v45, %v237
    %v239 = vand.u32 %v238, 4294901760
    %v240 = vsub.f32 %v238, %v239
    %v241 = vand.u32 %v240, 4294901760
    %242 = vmatpush1.msra.mxu0 %v241
    %243 = vmatprep.subr.mxu0 0.0
    %v244 = vand.u32 %v46, 4294901760
    %v245 = vsub.f32 %v46, %v244
    %v246 = vand.u32 %v245, 4294901760
    %v247 = vsub.f32 %v245, %v246
    %v248 = vand.u32 %v247, 4294901760
    %249 = vmatpush1.msra.mxu0 %v248
    %250 = vmatprep.subr.mxu0 0.0
    %251 = vmatpush1.msra.mxu0 0.0
    %252 = vmatprep.subr.mxu0 0.0
    %253 = vmatpush1.msra.mxu0 0.0
    %254 = vmatprep.subr.mxu0 0.0
    %255 = vmatpush1.msra.mxu0 0.0
    %256 = vmatprep.subr.mxu0 0.0
    %257 = vmatpush1.msra.mxu0 0.0
    %258 = vmatprep.subr.mxu0 0.0
    %259 = vmatpush1.msra.mxu0 0.0
    %260 = vmatprep.subr.mxu0 0.0
    %261 = vmatpush1.msra.mxu0 0.0
    %262 = vmatprep.subr.mxu0 0.0
    %263 = vmatpush1.msra.mxu0 0.0
    %264 = vmatprep.subr.mxu0 0.0
    %265 = vmatpush1.msra.mxu0 0.0
    %266 = vmatprep.subr.mxu0 0.0
    %267 = vmatpush1.msra.mxu0 0.0
    %268 = vmatprep.subr.mxu0 0.0
    %269 = vmatpush1.msra.mxu0 0.0
    %270 = vmatprep.subr.mxu0 0.0
    %271 = vmatpush1.msra.mxu0 0.0
    %272 = vmatprep.subr.mxu0 0.0
    %273 = vmatpush1.msra.mxu0 0.0
    %274 = vmatprep.subr.mxu0 0.0
    %275 = vmatpush1.msra.mxu0 0.0
    %276 = vmatprep.subr.mxu0 0.0
    %277 = vmatpush1.msra.mxu0 0.0
    %278 = vmatprep.subr.mxu0 0.0
    %279 = vmatpush1.msra.mxu0 0.0
    %280 = vmatprep.subr.mxu0 0.0
    %281 = vmatpush1.msra.mxu0 0.0
    %282 = vmatprep.mubr.f32.mxu0 0.0
    %v283 = vand.u32 %v30, 4294901760
    %284 = vmatmul.mubr.f32.gmra.mrb[0].mxu0 %v283
    %v285 = vpop.f32.mrb[0].mxu0
    %v286 = vadd.f32 %v135, %v285
    %v287 = vpop.f32.mrb[0].mxu0
    %288 = vdwg.mxu0
    %289 = vmatprep.subr.mxu0 0.0
    %v290 = vand.u32 %v31, 4294901760
    %v291 = vsub.f32 %v31, %v290
    %292 = vmatpush1.msra.mxu0 %v291
    %293 = vmatprep.subr.mxu0 0.0
    %v294 = vand.u32 %v32, 4294901760
    %v295 = vsub.f32 %v32, %v294
    %296 = vmatpush1.msra.mxu0 %v295
    %297 = vmatprep.subr.mxu0 0.0
    %v298 = vand.u32 %v33, 4294901760
    %v299 = vsub.f32 %v33, %v298
    %300 = vmatpush1.msra.mxu0 %v299
    %301 = vmatprep.subr.mxu0 0.0
    %v302 = vand.u32 %v34, 4294901760
    %v303 = vsub.f32 %v34, %v302
    %304 = vmatpush1.msra.mxu0 %v303
    %305 = vmatprep.subr.mxu0 0.0
    %v306 = vand.u32 %v35, 4294901760
    %v307 = vsub.f32 %v35, %v306
    %308 = vmatpush1.msra.mxu0 %v307
    %309 = vmatprep.subr.mxu0 0.0
    %v310 = vand.u32 %v36, 4294901760
    %v311 = vsub.f32 %v36, %v310
    %312 = vmatpush1.msra.mxu0 %v311
    %313 = vmatprep.subr.mxu0 0.0
    %v314 = vand.u32 %v37, 4294901760
    %v315 = vsub.f32 %v37, %v314
    %316 = vmatpush1.msra.mxu0 %v315
    %317 = vmatprep.subr.mxu0 0.0
    %v318 = vand.u32 %v38, 4294901760
    %v319 = vsub.f32 %v38, %v318
    %320 = vmatpush1.msra.mxu0 %v319
    %321 = vmatprep.subr.mxu0 0.0
    %v322 = vand.u32 %v39, 4294901760
    %v323 = vsub.f32 %v39, %v322
    %324 = vmatpush1.msra.mxu0 %v323
    %325 = vmatprep.subr.mxu0 0.0
    %v326 = vand.u32 %v40, 4294901760
    %v327 = vsub.f32 %v40, %v326
    %328 = vmatpush1.msra.mxu0 %v327
    %329 = vmatprep.subr.mxu0 0.0
    %v330 = vand.u32 %v41, 4294901760
    %v331 = vsub.f32 %v41, %v330
    %332 = vmatpush1.msra.mxu0 %v331
    %333 = vmatprep.subr.mxu0 0.0
    %v334 = vand.u32 %v42, 4294901760
    %v335 = vsub.f32 %v42, %v334
    %336 = vmatpush1.msra.mxu0 %v335
    %337 = vmatprep.subr.mxu0 0.0
    %v338 = vand.u32 %v43, 4294901760
    %v339 = vsub.f32 %v43, %v338
    %340 = vmatpush1.msra.mxu0 %v339
    %341 = vmatprep.subr.mxu0 0.0
    %v342 = vand.u32 %v44, 4294901760
    %v343 = vsub.f32 %v44, %v342
    %344 = vmatpush1.msra.mxu0 %v343
    %345 = vmatprep.subr.mxu0 0.0
    %v346 = vand.u32 %v45, 4294901760
    %v347 = vsub.f32 %v45, %v346
    %348 = vmatpush1.msra.mxu0 %v347
    %349 = vmatprep.subr.mxu0 0.0
    %v350 = vand.u32 %v46, 4294901760
    %v351 = vsub.f32 %v46, %v350
    %352 = vmatpush1.msra.mxu0 %v351
    %353 = vmatprep.subr.mxu0 0.0
    %354 = vmatpush1.msra.mxu0 0.0
    %355 = vmatprep.subr.mxu0 0.0
    %356 = vmatpush1.msra.mxu0 0.0
    %357 = vmatprep.subr.mxu0 0.0
    %358 = vmatpush1.msra.mxu0 0.0
    %359 = vmatprep.subr.mxu0 0.0
    %360 = vmatpush1.msra.mxu0 0.0
    %361 = vmatprep.subr.mxu0 0.0
    %362 = vmatpush1.msra.mxu0 0.0
    %363 = vmatprep.subr.mxu0 0.0
    %364 = vmatpush1.msra.mxu0 0.0
    %365 = vmatprep.subr.mxu0 0.0
    %366 = vmatpush1.msra.mxu0 0.0
    %367 = vmatprep.subr.mxu0 0.0
    %368 = vmatpush1.msra.mxu0 0.0
    %369 = vmatprep.subr.mxu0 0.0
    %370 = vmatpush1.msra.mxu0 0.0
    %371 = vmatprep.subr.mxu0 0.0
    %372 = vmatpush1.msra.mxu0 0.0
    %373 = vmatprep.subr.mxu0 0.0
    %374 = vmatpush1.msra.mxu0 0.0
    %375 = vmatprep.subr.mxu0 0.0
    %376 = vmatpush1.msra.mxu0 0.0
    %377 = vmatprep.subr.mxu0 0.0
    %378 = vmatpush1.msra.mxu0 0.0
    %379 = vmatprep.subr.mxu0 0.0
    %380 = vmatpush1.msra.mxu0 0.0
    %381 = vmatprep.subr.mxu0 0.0
    %382 = vmatpush1.msra.mxu0 0.0
    %383 = vmatprep.subr.mxu0 0.0
    %384 = vmatpush1.msra.mxu0 0.0
    %385 = vmatprep.mubr.f32.mxu0 0.0
    %v386 = vand.u32 %v30, 4294901760
    %v387 = vsub.f32 %v30, %v386
    %388 = vmatmul.mubr.f32.gmra.mrb[0].mxu0 %v387
    %v389 = vpop.f32.mrb[0].mxu0
    %v390 = vadd.f32 %v286, %v389
    %v391 = vpop.f32.mrb[0].mxu0
    %392 = vdwg.mxu0
    %393 = vmatprep.subr.mxu0 0.0
    %v394 = vand.u32 %v31, 4294901760
    %395 = vmatpush1.msra.mxu0 %v394
    %396 = vmatprep.subr.mxu0 0.0
    %v397 = vand.u32 %v32, 4294901760
    %398 = vmatpush1.msra.mxu0 %v397
    %399 = vmatprep.subr.mxu0 0.0
    %v400 = vand.u32 %v33, 4294901760
    %401 = vmatpush1.msra.mxu0 %v400
    %402 = vmatprep.subr.mxu0 0.0
    %v403 = vand.u32 %v34, 4294901760
    %404 = vmatpush1.msra.mxu0 %v403
    %405 = vmatprep.subr.mxu0 0.0
    %v406 = vand.u32 %v35, 4294901760
    %407 = vmatpush1.msra.mxu0 %v406
    %408 = vmatprep.subr.mxu0 0.0
    %v409 = vand.u32 %v36, 4294901760
    %410 = vmatpush1.msra.mxu0 %v409
    %411 = vmatprep.subr.mxu0 0.0
    %v412 = vand.u32 %v37, 4294901760
    %413 = vmatpush1.msra.mxu0 %v412
    %414 = vmatprep.subr.mxu0 0.0
    %v415 = vand.u32 %v38, 4294901760
    %416 = vmatpush1.msra.mxu0 %v415
    %417 = vmatprep.subr.mxu0 0.0
    %v418 = vand.u32 %v39, 4294901760
    %419 = vmatpush1.msra.mxu0 %v418
    %420 = vmatprep.subr.mxu0 0.0
    %v421 = vand.u32 %v40, 4294901760
    %422 = vmatpush1.msra.mxu0 %v421
    %423 = vmatprep.subr.mxu0 0.0
    %v424 = vand.u32 %v41, 4294901760
    %425 = vmatpush1.msra.mxu0 %v424
    %426 = vmatprep.subr.mxu0 0.0
    %v427 = vand.u32 %v42, 4294901760
    %428 = vmatpush1.msra.mxu0 %v427
    %429 = vmatprep.subr.mxu0 0.0
    %v430 = vand.u32 %v43, 4294901760
    %431 = vmatpush1.msra.mxu0 %v430
    %432 = vmatprep.subr.mxu0 0.0
    %v433 = vand.u32 %v44, 4294901760
    %434 = vmatpush1.msra.mxu0 %v433
    %435 = vmatprep.subr.mxu0 0.0
    %v436 = vand.u32 %v45, 4294901760
    %437 = vmatpush1.msra.mxu0 %v436
    %438 = vmatprep.subr.mxu0 0.0
    %v439 = vand.u32 %v46, 4294901760
    %440 = vmatpush1.msra.mxu0 %v439
    %441 = vmatprep.subr.mxu0 0.0
    %442 = vmatpush1.msra.mxu0 0.0
    %443 = vmatprep.subr.mxu0 0.0
    %444 = vmatpush1.msra.mxu0 0.0
    %445 = vmatprep.subr.mxu0 0.0
    %446 = vmatpush1.msra.mxu0 0.0
    %447 = vmatprep.subr.mxu0 0.0
    %448 = vmatpush1.msra.mxu0 0.0
    %449 = vmatprep.subr.mxu0 0.0
    %450 = vmatpush1.msra.mxu0 0.0
    %451 = vmatprep.subr.mxu0 0.0
    %452 = vmatpush1.msra.mxu0 0.0
    %453 = vmatprep.subr.mxu0 0.0
    %454 = vmatpush1.msra.mxu0 0.0
    %455 = vmatprep.subr.mxu0 0.0
    %456 = vmatpush1.msra.mxu0 0.0
    %457 = vmatprep.subr.mxu0 0.0
    %458 = vmatpush1.msra.mxu0 0.0
    %459 = vmatprep.subr.mxu0 0.0
    %460 = vmatpush1.msra.mxu0 0.0
    %461 = vmatprep.subr.mxu0 0.0
    %462 = vmatpush1.msra.mxu0 0.0
    %463 = vmatprep.subr.mxu0 0.0
    %464 = vmatpush1.msra.mxu0 0.0
    %465 = vmatprep.subr.mxu0 0.0
    %466 = vmatpush1.msra.mxu0 0.0
    %467 = vmatprep.subr.mxu0 0.0
    %468 = vmatpush1.msra.mxu0 0.0
    %469 = vmatprep.subr.mxu0 0.0
    %470 = vmatpush1.msra.mxu0 0.0
    %471 = vmatprep.subr.mxu0 0.0
    %472 = vmatpush1.msra.mxu0 0.0
    %473 = vmatprep.mubr.f32.mxu0 0.0
    %v474 = vand.u32 %v30, 4294901760
    %v475 = vsub.f32 %v30, %v474
    %v476 = vand.u32 %v475, 4294901760
    %477 = vmatmul.mubr.f32.gmra.mrb[0].mxu0 %v476
    %v478 = vpop.f32.mrb[0].mxu0
    %v479 = vadd.f32 %v390, %v478
    %v480 = vpop.f32.mrb[0].mxu0
    %481 = vdwg.mxu0
    %482 = vmatprep.subr.mxu0 0.0
    %v483 = vand.u32 %v31, 4294901760
    %v484 = vsub.f32 %v31, %v483
    %v485 = vand.u32 %v484, 4294901760
    %486 = vmatpush1.msra.mxu0 %v485
    %487 = vmatprep.subr.mxu0 0.0
    %v488 = vand.u32 %v32, 4294901760
    %v489 = vsub.f32 %v32, %v488
    %v490 = vand.u32 %v489, 4294901760
    %491 = vmatpush1.msra.mxu0 %v490
    %492 = vmatprep.subr.mxu0 0.0
    %v493 = vand.u32 %v33, 4294901760
    %v494 = vsub.f32 %v33, %v493
    %v495 = vand.u32 %v494, 4294901760
    %496 = vmatpush1.msra.mxu0 %v495
    %497 = vmatprep.subr.mxu0 0.0
    %v498 = vand.u32 %v34, 4294901760
    %v499 = vsub.f32 %v34, %v498
    %v500 = vand.u32 %v499, 4294901760
    %501 = vmatpush1.msra.mxu0 %v500
    %502 = vmatprep.subr.mxu0 0.0
    %v503 = vand.u32 %v35, 4294901760
    %v504 = vsub.f32 %v35, %v503
    %v505 = vand.u32 %v504, 4294901760
    %506 = vmatpush1.msra.mxu0 %v505
    %507 = vmatprep.subr.mxu0 0.0
    %v508 = vand.u32 %v36, 4294901760
    %v509 = vsub.f32 %v36, %v508
    %v510 = vand.u32 %v509, 4294901760
    %511 = vmatpush1.msra.mxu0 %v510
    %512 = vmatprep.subr.mxu0 0.0
    %v513 = vand.u32 %v37, 4294901760
    %v514 = vsub.f32 %v37, %v513
    %v515 = vand.u32 %v514, 4294901760
    %516 = vmatpush1.msra.mxu0 %v515
    %517 = vmatprep.subr.mxu0 0.0
    %v518 = vand.u32 %v38, 4294901760
    %v519 = vsub.f32 %v38, %v518
    %v520 = vand.u32 %v519, 4294901760
    %521 = vmatpush1.msra.mxu0 %v520
    %522 = vmatprep.subr.mxu0 0.0
    %v523 = vand.u32 %v39, 4294901760
    %v524 = vsub.f32 %v39, %v523
    %v525 = vand.u32 %v524, 4294901760
    %526 = vmatpush1.msra.mxu0 %v525
    %527 = vmatprep.subr.mxu0 0.0
    %v528 = vand.u32 %v40, 4294901760
    %v529 = vsub.f32 %v40, %v528
    %v530 = vand.u32 %v529, 4294901760
    %531 = vmatpush1.msra.mxu0 %v530
    %532 = vmatprep.subr.mxu0 0.0
    %v533 = vand.u32 %v41, 4294901760
    %v534 = vsub.f32 %v41, %v533
    %v535 = vand.u32 %v534, 4294901760
    %536 = vmatpush1.msra.mxu0 %v535
    %537 = vmatprep.subr.mxu0 0.0
    %v538 = vand.u32 %v42, 4294901760
    %v539 = vsub.f32 %v42, %v538
    %v540 = vand.u32 %v539, 4294901760
    %541 = vmatpush1.msra.mxu0 %v540
    %542 = vmatprep.subr.mxu0 0.0
    %v543 = vand.u32 %v43, 4294901760
    %v544 = vsub.f32 %v43, %v543
    %v545 = vand.u32 %v544, 4294901760
    %546 = vmatpush1.msra.mxu0 %v545
    %547 = vmatprep.subr.mxu0 0.0
    %v548 = vand.u32 %v44, 4294901760
    %v549 = vsub.f32 %v44, %v548
    %v550 = vand.u32 %v549, 4294901760
    %551 = vmatpush1.msra.mxu0 %v550
    %552 = vmatprep.subr.mxu0 0.0
    %v553 = vand.u32 %v45, 4294901760
    %v554 = vsub.f32 %v45, %v553
    %v555 = vand.u32 %v554, 4294901760
    %556 = vmatpush1.msra.mxu0 %v555
    %557 = vmatprep.subr.mxu0 0.0
    %v558 = vand.u32 %v46, 4294901760
    %v559 = vsub.f32 %v46, %v558
    %v560 = vand.u32 %v559, 4294901760
    %561 = vmatpush1.msra.mxu0 %v560
    %562 = vmatprep.subr.mxu0 0.0
    %563 = vmatpush1.msra.mxu0 0.0
    %564 = vmatprep.subr.mxu0 0.0
    %565 = vmatpush1.msra.mxu0 0.0
    %566 = vmatprep.subr.mxu0 0.0
    %567 = vmatpush1.msra.mxu0 0.0
    %568 = vmatprep.subr.mxu0 0.0
    %569 = vmatpush1.msra.mxu0 0.0
    %570 = vmatprep.subr.mxu0 0.0
    %571 = vmatpush1.msra.mxu0 0.0
    %572 = vmatprep.subr.mxu0 0.0
    %573 = vmatpush1.msra.mxu0 0.0
    %574 = vmatprep.subr.mxu0 0.0
    %575 = vmatpush1.msra.mxu0 0.0
    %576 = vmatprep.subr.mxu0 0.0
    %577 = vmatpush1.msra.mxu0 0.0
    %578 = vmatprep.subr.mxu0 0.0
    %579 = vmatpush1.msra.mxu0 0.0
    %580 = vmatprep.subr.mxu0 0.0
    %581 = vmatpush1.msra.mxu0 0.0
    %582 = vmatprep.subr.mxu0 0.0
    %583 = vmatpush1.msra.mxu0 0.0
    %584 = vmatprep.subr.mxu0 0.0
    %585 = vmatpush1.msra.mxu0 0.0
    %586 = vmatprep.subr.mxu0 0.0
    %587 = vmatpush1.msra.mxu0 0.0
    %588 = vmatprep.subr.mxu0 0.0
    %589 = vmatpush1.msra.mxu0 0.0
    %590 = vmatprep.subr.mxu0 0.0
    %591 = vmatpush1.msra.mxu0 0.0
    %592 = vmatprep.subr.mxu0 0.0
    %593 = vmatpush1.msra.mxu0 0.0
    %594 = vmatprep.mubr.f32.mxu0 0.0
    %v595 = vand.u32 %v30, 4294901760
    %596 = vmatmul.mubr.f32.gmra.mrb[0].mxu0 %v595
    %v597 = vpop.f32.mrb[0].mxu0
    %v598 = vadd.f32 %v479, %v597
    %v599 = vpop.f32.mrb[0].mxu0
    %600 = vdwg.mxu0
    %601 = vmatprep.subr.mxu0 0.0
    %v602 = vand.u32 %v31, 4294901760
    %603 = vmatpush1.msra.mxu0 %v602
    %604 = vmatprep.subr.mxu0 0.0
    %v605 = vand.u32 %v32, 4294901760
    %606 = vmatpush1.msra.mxu0 %v605
    %607 = vmatprep.subr.mxu0 0.0
    %v608 = vand.u32 %v33, 4294901760
    %609 = vmatpush1.msra.mxu0 %v608
    %610 = vmatprep.subr.mxu0 0.0
    %v611 = vand.u32 %v34, 4294901760
    %612 = vmatpush1.msra.mxu0 %v611
    %613 = vmatprep.subr.mxu0 0.0
    %v614 = vand.u32 %v35, 4294901760
    %615 = vmatpush1.msra.mxu0 %v614
    %616 = vmatprep.subr.mxu0 0.0
    %v617 = vand.u32 %v36, 4294901760
    %618 = vmatpush1.msra.mxu0 %v617
    %619 = vmatprep.subr.mxu0 0.0
    %v620 = vand.u32 %v37, 4294901760
    %621 = vmatpush1.msra.mxu0 %v620
    %622 = vmatprep.subr.mxu0 0.0
    %v623 = vand.u32 %v38, 4294901760
    %624 = vmatpush1.msra.mxu0 %v623
    %625 = vmatprep.subr.mxu0 0.0
    %v626 = vand.u32 %v39, 4294901760
    %627 = vmatpush1.msra.mxu0 %v626
    %628 = vmatprep.subr.mxu0 0.0
    %v629 = vand.u32 %v40, 4294901760
    %630 = vmatpush1.msra.mxu0 %v629
    %631 = vmatprep.subr.mxu0 0.0
    %v632 = vand.u32 %v41, 4294901760
    %633 = vmatpush1.msra.mxu0 %v632
    %634 = vmatprep.subr.mxu0 0.0
    %v635 = vand.u32 %v42, 4294901760
    %636 = vmatpush1.msra.mxu0 %v635
    %637 = vmatprep.subr.mxu0 0.0
    %v638 = vand.u32 %v43, 4294901760
    %639 = vmatpush1.msra.mxu0 %v638
    %640 = vmatprep.subr.mxu0 0.0
    %v641 = vand.u32 %v44, 4294901760
    %642 = vmatpush1.msra.mxu0 %v641
    %643 = vmatprep.subr.mxu0 0.0
    %v644 = vand.u32 %v45, 4294901760
    %645 = vmatpush1.msra.mxu0 %v644
    %646 = vmatprep.subr.mxu0 0.0
    %v647 = vand.u32 %v46, 4294901760
    %648 = vmatpush1.msra.mxu0 %v647
    %649 = vmatprep.subr.mxu0 0.0
    %650 = vmatpush1.msra.mxu0 0.0
    %651 = vmatprep.subr.mxu0 0.0
    %652 = vmatpush1.msra.mxu0 0.0
    %653 = vmatprep.subr.mxu0 0.0
    %654 = vmatpush1.msra.mxu0 0.0
    %655 = vmatprep.subr.mxu0 0.0
    %656 = vmatpush1.msra.mxu0 0.0
    %657 = vmatprep.subr.mxu0 0.0
    %658 = vmatpush1.msra.mxu0 0.0
    %659 = vmatprep.subr.mxu0 0.0
    %660 = vmatpush1.msra.mxu0 0.0
    %661 = vmatprep.subr.mxu0 0.0
    %662 = vmatpush1.msra.mxu0 0.0
    %663 = vmatprep.subr.mxu0 0.0
    %664 = vmatpush1.msra.mxu0 0.0
    %665 = vmatprep.subr.mxu0 0.0
    %666 = vmatpush1.msra.mxu0 0.0
    %667 = vmatprep.subr.mxu0 0.0
    %668 = vmatpush1.msra.mxu0 0.0
    %669 = vmatprep.subr.mxu0 0.0
    %670 = vmatpush1.msra.mxu0 0.0
    %671 = vmatprep.subr.mxu0 0.0
    %672 = vmatpush1.msra.mxu0 0.0
    %673 = vmatprep.subr.mxu0 0.0
    %674 = vmatpush1.msra.mxu0 0.0
    %675 = vmatprep.subr.mxu0 0.0
    %676 = vmatpush1.msra.mxu0 0.0
    %677 = vmatprep.subr.mxu0 0.0
    %678 = vmatpush1.msra.mxu0 0.0
    %679 = vmatprep.subr.mxu0 0.0
    %680 = vmatpush1.msra.mxu0 0.0
    %681 = vmatprep.mubr.f32.mxu0 0.0
    %v682 = vand.u32 %v30, 4294901760
    %683 = vmatmul.mubr.f32.gmra.mrb[0].mxu0 %v682
    %v684 = vpop.f32.mrb[0].mxu0
    %v685 = vadd.f32 %v598, %v684
    %v686 = vpop.f32.mrb[0].mxu0
    %687 = vdwg.mxu0
    %v688 = vadd.f32 %v29, %v685
    %689 = vst [vmem:[#allocation2] sm:$0xff] %v688
  $region21: #{ordered_residual_1d.1} parent=0 // pred_fallthru
    _
  // Predicated region
  $region22: #{ordered_residual_1d.1} parent=0 // pred_check
    %p690 = pneg %p16
  $region23: #{ordered_residual_1d.1} parent=0 // pred_check_branch
    %692 = sbr.rel (%p690) target = $region25
  $region24: #{ordered_residual_1d.1} parent=0 // pred_region
    %v693 = vld [vmem:[%s3] sm:$0xff]
    %v694 = vld [vmem:[#allocation2] sm:$0xff]
    %v695 = vadd.f32 %v693, %v694
    %696 = vst [vmem:[%s4] sm:$0xff] %v695
  $region25: #{ordered_residual_1d.1} parent=0 // pred_fallthru
    _
  // Predicated region
  $region26: #{ordered_residual_1d.1} parent=0 // pred_check
    _
  $region27: #{ordered_residual_1d.1} parent=0 // pred_check_branch
    %698 = sbr.rel (0) target = $region29
  $region28: #{ordered_residual_1d.1} parent=0 // pred_region
    _
  $region29: #{ordered_residual_1d.1} parent=0 // pred_fallthru
    _
  // Predicated region
  $region30: #{ordered_residual_1d.1} parent=0 // pred_check
    _
  $region31: #{ordered_residual_1d.1} parent=0 // pred_check_branch
    %700 = sbr.rel (0) target = $region33
  $region32: #{ordered_residual_1d.1} parent=0 // pred_region
    _
  $region33: #{ordered_residual_1d.1} parent=0 // pred_fallthru
    _

</llo_original>
